<compile_context>
chip_gen: v5e
topology: v5e:2x2
jax: 0.10.0
libtpu: 0.0.40
codegen_flags: <defaults>
</compile_context>

<pallas_src>
import numpy as np
from itertools import combinations
from math import comb

import jax
import jax.numpy as jnp
from jax.experimental import pallas as pl
from jax.experimental.pallas import tpu as pltpu


# ----------------------------------------------------------------------------
# Buffer construction (init-time, deterministic; mirrors the torch code).
# Host-side numpy, exactly like the torch module's __init__.
# ----------------------------------------------------------------------------
def generate_antenna_selection_set(Nt, Nrf, Nk, num_target):
    assert Nt % Nk == 0, f"Illegal Nt={Nt}, Nk={Nk}"
    Ng = Nt // Nk
    maxSize = comb(Ng, Nrf)
    globalSet = np.zeros((maxSize, Nt, Nrf), dtype=np.float32)
    for idSel, active in enumerate(combinations(range(Ng), Nrf)):
        for idAnt, g in enumerate(active):
            globalSet[idSel, g * Nk:g * Nk + Nk, idAnt] = 1.0
    availableList = []
    selectSet = np.zeros((num_target, Nt, Nrf), dtype=np.float32)
    for idx in range(num_target):
        if len(availableList) == 0:
            availableList = list(range(maxSize))
        hamming = np.zeros(len(availableList), dtype=np.float32)
        for idAvail, cand in enumerate(availableList):
            if idx == 0:
                break
            cur = selectSet[:idx].sum(axis=-1)
            candExp = np.repeat(globalSet[cand].sum(axis=-1)[None, :], idx, axis=0)
            hamming[idAvail] = np.count_nonzero(cur != candExp)
        selectId = availableList[int(np.argmax(hamming))]
        selectSet[idx] = globalSet[selectId]
        availableList.remove(selectId)
    return selectSet


# ----------------------------------------------------------------------------
# Pallas kernel: fused FC + lane-packed beamformer merge + per-c Frobenius
# norm (segmented one-hot matmul) + rsqrt normalization + lane-dense stores.
# ----------------------------------------------------------------------------
def _make_kernel(NT, NRF, CS, DDIM, L):
    sqrt_nrf = float(np.sqrt(NRF))

    def kernel(x_ref, w_ref, e_ref, cset_ref, sred_ref, rexp_ref,
               cos_ref, sin_ref, dre_ref, dim_ref):
        x = x_ref[...]                                               # (TB, F+1)

        # --- fused FC (biases folded via the ones column): one MXU call ---
        fc = jnp.dot(x, w_ref[...],
                     preferred_element_type=jnp.float32)             # (TB, NT+2*DDIM)
        theta = fc[:, :NT]
        d_re = fc[:, NT:NT + DDIM]
        d_im = fc[:, NT + DDIM:NT + 2 * DDIM]

        # --- one-hot expansion matmul: tiles theta and lane-aligns the D
        #     coefficients with cset on the packed axis j = r*CS*NT + c*NT + t ---
        ex = jnp.dot(fc, e_ref[...],
                     preferred_element_type=jnp.float32)             # (TB, L + 2*NRF*L)
        cos_rep = jnp.cos(ex[:, :L])
        sin_rep = jnp.sin(ex[:, :L])

        # --- gsm_merge_beamformer: full-lane VPU ops, short static k loop ---
        w_re = cset_ref[0:1, :] * ex[:, L:2 * L]
        w_im = cset_ref[0:1, :] * ex[:, L + NRF * L:L + NRF * L + L]
        for k in range(1, NRF):
            ck = cset_ref[k:k + 1, :]                                # (1, L)
            w_re = w_re + ck * ex[:, L + k * L:L + (k + 1) * L]
            w_im = w_im + ck * ex[:, L + NRF * L + k * L:L + NRF * L + (k + 1) * L]

        v_re = cos_rep * w_re - sin_rep * w_im
        v_im = cos_rep * w_im + sin_rep * w_re
        sq = v_re * v_re + v_im * v_im                               # (TB, L)

        # --- per-c segmented reduction (one-hot matmul) + rsqrt normalization ---
        norm2 = jnp.dot(sq, sred_ref[...],
                        preferred_element_type=jnp.float32)          # (TB, CS)
        scale = sqrt_nrf * jax.lax.rsqrt(norm2)                      # EUP rsqrt
        scale_full = jnp.dot(scale, rexp_ref[...],
                             preferred_element_type=jnp.float32)     # (TB, DDIM)

        # --- lane-dense single stores ---
        cos_ref[...] = jnp.cos(theta)
        sin_ref[...] = jnp.sin(theta)
        dre_ref[...] = d_re * scale_full
        dim_ref[...] = d_im * scale_full

    return kernel


def subarray_gsm_beamforming(x, params, CSet, Nt, Nrf, Nk, batch_tile=512):
    B, F = x.shape
    CS = CSet.shape[0]
    NT, NRF = Nt, Nrf
    DDIM = CS * NRF * NRF
    L = NRF * CS * NT                      # packed lane axis:  j = r*CS*NT + c*NT + t
    NFC = NT + 2 * DDIM                    # fused FC output width
    NEXP = L + 2 * NRF * L                 # [theta_rep | d_re_exp(k) | d_im_exp(k)]
    wA, bA, wDr, bDr, wDi, bDi = params

    # ---- glue: fused bias-folded weight --------------------------------------
    W_fc = jnp.concatenate([wA.T, wDr.T, wDi.T], axis=1)             # (F, NFC)
    b_fc = jnp.concatenate([bA, bDr, bDi]).reshape(1, NFC)
    W_aug = jnp.concatenate([W_fc, b_fc], axis=0)                    # (F+1, NFC)

    # ---- glue: one-hot expansion / reduction matrices (init-time numpy) ------
    CSet_np = np.asarray(CSet, np.float32)
    E = np.zeros((NFC, NEXP), np.float32)
    for r in range(NRF):
        for c in range(CS):
            base = r * CS * NT + c * NT
            E[np.arange(NT), base + np.arange(NT)] = 1.0             # theta tiled
            for k in range(NRF):
                src = c * NRF * NRF + k * NRF + r
                E[NT + src, L + k * L + base:L + k * L + base + NT] = 1.0
                E[NT + DDIM + src,
                  L + NRF * L + k * L + base:L + NRF * L + k * L + base + NT] = 1.0

    cset_kct = np.transpose(CSet_np, (2, 0, 1))                      # (k, c, t)
    cset_rep = np.broadcast_to(cset_kct[:, None, :, :],
                               (NRF, NRF, CS, NT)).reshape(NRF, L).astype(np.float32)

    S_red = np.zeros((L, CS), np.float32)                            # segmented sum
    for r in range(NRF):
        for c in range(CS):
            base = r * CS * NT + c * NT
            S_red[base:base + NT, c] = 1.0

    R_exp = np.zeros((CS, DDIM), np.float32)                         # per-c scale -> DDIM
    for c in range(CS):
        R_exp[c, c * NRF * NRF:(c + 1) * NRF * NRF] = 1.0

    # ---- batch tiling: parallel grid axis (both TCs on v7x) ------------------
    TB = B if B <= batch_tile else batch_tile                        # batch_tile % 8 == 0
    B_pad = -(-B // TB) * TB
    x_aug = jnp.concatenate([x, jnp.ones((B, 1), x.dtype)], axis=1)  # bias column
    if B_pad != B:
        x_aug = jnp.pad(x_aug, ((0, B_pad - B), (0, 0)))

    kernel = _make_kernel(NT, NRF, CS, DDIM, L)
    resident = lambda shape: pl.BlockSpec(shape, lambda i: (0, 0))   # stays in VMEM
    batched = lambda n: pl.BlockSpec((TB, n), lambda i: (i, 0))

    cos_t, sin_t, d_re_n, d_im_n = pl.pallas_call(
        kernel,
        grid=(B_pad // TB,),
        in_specs=[batched(F + 1),
                  resident((F + 1, NFC)),
                  resident((NFC, NEXP)),
                  resident((NRF, L)),
                  resident((L, CS)),
                  resident((CS, DDIM))],
        out_specs=(batched(NT), batched(NT), batched(DDIM), batched(DDIM)),
        out_shape=(jax.ShapeDtypeStruct((B_pad, NT), jnp.float32),
                   jax.ShapeDtypeStruct((B_pad, NT), jnp.float32),
                   jax.ShapeDtypeStruct((B_pad, DDIM), jnp.float32),
                   jax.ShapeDtypeStruct((B_pad, DDIM), jnp.float32)),
        compiler_params=pltpu.CompilerParams(
            dimension_semantics=("parallel",)),
    )(x_aug, W_aug, jnp.asarray(E), jnp.asarray(cset_rep),
      jnp.asarray(S_red), jnp.asarray(R_exp))

    cos_t, sin_t = cos_t[:B], sin_t[:B]
    d_re_n, d_im_n = d_re_n[:B], d_im_n[:B]

    # diag_embed outside the kernel (avoids mostly-zero masked stores in VMEM)
    eye = jnp.eye(Nt, dtype=jnp.float32)
    A_real = (cos_t[:, :, None] * eye)[:, None, :, :]                # (B, 1, Nt, Nt)
    A_imag = (sin_t[:, :, None] * eye)[:, None, :, :]
    D_real = d_re_n.reshape(B, CS, Nrf, Nrf)
    D_imag = d_im_n.reshape(B, CS, Nrf, Nrf)
    return A_real, A_imag, D_real, D_imag, CSet


# ----------------------------------------------------------------------------
# Pure-numpy reference of the torch forward (for validation).
# ----------------------------------------------------------------------------
def reference_forward(x, params, CSet, Nt, Nrf):
    x = np.asarray(x, np.float64)
    wA, bA, wDr, bDr, wDi, bDi = [np.asarray(p, np.float64) for p in params]
    CSet = np.asarray(CSet, np.float64)
    B, CS = x.shape[0], CSet.shape[0]
    theta = x @ wA.T + bA
    A_real = (np.cos(theta)[:, :, None] * np.eye(Nt))[:, None]       # (B,1,Nt,Nt)
    A_imag = (np.sin(theta)[:, :, None] * np.eye(Nt))[:, None]
    D_real = (x @ wDr.T + bDr).reshape(B, CS, Nrf, Nrf)
    D_imag = (x @ wDi.T + bDi).reshape(B, CS, Nrf, Nrf)
    C = CSet[None]                                                    # (1,CS,Nt,Nrf)
    ArC = np.matmul(A_real, C)
    AiC = np.matmul(A_imag, C)
    V_real = np.matmul(ArC, D_real) - np.matmul(AiC, D_imag)
    V_imag = np.matmul(ArC, D_imag) + np.matmul(AiC, D_real)
    V_F = np.sqrt(np.sum(V_real ** 2 + V_imag ** 2, axis=(2, 3)))[:, :, None, None]
    return A_real, A_imag, np.sqrt(Nrf) * D_real / V_F, np.sqrt(Nrf) * D_imag / V_F


if __name__ == "__main__":
    Nt, Nrf, Nk, feature_dim, batch = 16, 2, 4, 32, 2
    Ng = Nt // Nk
    maxCSetSize = comb(Ng, Nrf)
    CSetSize = int(2 ** int(np.floor(np.log2(maxCSetSize))))
    DDIM = CSetSize * Nrf * Nrf

    CSet_np = generate_antenna_selection_set(Nt, Nrf, Nk, CSetSize)
    CSet = jnp.asarray(CSet_np)

    key = jax.random.PRNGKey(0)
    ks = jax.random.split(key, 7)
    wA = 0.1 * jax.random.normal(ks[0], (Nt, feature_dim), jnp.float32)
    bA = 0.1 * jax.random.normal(ks[1], (Nt,), jnp.float32)
    wDr = 0.1 * jax.random.normal(ks[2], (DDIM, feature_dim), jnp.float32)
    bDr = 0.1 * jax.random.normal(ks[3], (DDIM,), jnp.float32)
    wDi = 0.1 * jax.random.normal(ks[4], (DDIM, feature_dim), jnp.float32)
    bDi = 0.1 * jax.random.normal(ks[5], (DDIM,), jnp.float32)
    x = jax.random.normal(ks[6], (batch, feature_dim), jnp.float32)
    params = (wA, bA, wDr, bDr, wDi, bDi)

    outs = jax.block_until_ready(
        subarray_gsm_beamforming(x, params, CSet, Nt, Nrf, Nk))
    A_real, A_imag, D_real, D_imag, CSet_out = outs

    rA_r, rA_i, rD_r, rD_i = reference_forward(x, params, CSet_np, Nt, Nrf)
    assert np.allclose(np.asarray(A_real), rA_r, rtol=2e-2, atol=2e-3)
    assert np.allclose(np.asarray(A_imag), rA_i, rtol=2e-2, atol=2e-3)
    assert np.allclose(np.asarray(D_real), rD_r, rtol=2e-2, atol=2e-3)
    assert np.allclose(np.asarray(D_imag), rD_i, rtol=2e-2, atol=2e-3)
    assert np.allclose(np.asarray(CSet_out), CSet_np)

    print("KERNEL_OK")
</pallas_src>

<mosaic_0001>
module attributes {stable_mosaic.version = 11 : i64} {
  func.func @kernel(%arg0: i32, %arg1: memref<2x33xf32, #tpu.memory_space<vmem>>, %arg2: memref<33x48xf32, #tpu.memory_space<vmem>>, %arg3: memref<48x640xf32, #tpu.memory_space<vmem>>, %arg4: memref<2x128xf32, #tpu.memory_space<vmem>>, %arg5: memref<128x4xf32, #tpu.memory_space<vmem>>, %arg6: memref<4x16xf32, #tpu.memory_space<vmem>>, %arg7: memref<2x16xf32, #tpu.memory_space<vmem>>, %arg8: memref<2x16xf32, #tpu.memory_space<vmem>>, %arg9: memref<2x16xf32, #tpu.memory_space<vmem>>, %arg10: memref<2x16xf32, #tpu.memory_space<vmem>>) attributes {dimension_semantics = [#tpu.dimension_semantics<parallel>], iteration_bounds = array<i64: 1>, scalar_prefetch = 0 : i64, scratch_operands = 0 : i64, tpu.core_type = #tpu.core_type<tc>, window_params = [{transform_indices = @transform_0, window_bounds = array<i64: 2, 33>}, {pipeline_mode = #tpu.pipeline_mode<synchronous>, transform_indices = @transform_1, window_bounds = array<i64: 33, 48>}, {pipeline_mode = #tpu.pipeline_mode<synchronous>, transform_indices = @transform_2, window_bounds = array<i64: 48, 640>}, {pipeline_mode = #tpu.pipeline_mode<synchronous>, transform_indices = @transform_3, window_bounds = array<i64: 2, 128>}, {pipeline_mode = #tpu.pipeline_mode<synchronous>, transform_indices = @transform_4, window_bounds = array<i64: 128, 4>}, {pipeline_mode = #tpu.pipeline_mode<synchronous>, transform_indices = @transform_5, window_bounds = array<i64: 4, 16>}, {transform_indices = @transform_6, window_bounds = array<i64: 2, 16>}, {transform_indices = @transform_7, window_bounds = array<i64: 2, 16>}, {transform_indices = @transform_8, window_bounds = array<i64: 2, 16>}, {transform_indices = @transform_9, window_bounds = array<i64: 2, 16>}]} {
    %c0 = arith.constant 0 : index
    %c0_0 = arith.constant 0 : index
    %0 = vector.load %arg1[%c0, %c0_0] : memref<2x33xf32, #tpu.memory_space<vmem>>, vector<2x33xf32>
    %c0_1 = arith.constant 0 : index
    %c0_2 = arith.constant 0 : index
    %1 = vector.load %arg2[%c0_1, %c0_2] : memref<33x48xf32, #tpu.memory_space<vmem>>, vector<33x48xf32>
    %cst = arith.constant dense<0.000000e+00> : vector<2x48xf32>
    %2 = tpu.matmul %0, %1, %cst {dimension_numbers = #tpu.dot_dimension_numbers<[1], [0], [0], [1], [0, 0, 1, 1], [], []>} : vector<2x33xf32>, vector<33x48xf32>, vector<2x48xf32> -> vector<2x48xf32>
    %3 = vector.extract_strided_slice %2 {offsets = [0, 0], sizes = [2, 16], strides = [1, 1]} : vector<2x48xf32> to vector<2x16xf32>
    %4 = vector.extract_strided_slice %2 {offsets = [0, 16], sizes = [2, 16], strides = [1, 1]} : vector<2x48xf32> to vector<2x16xf32>
    %5 = vector.extract_strided_slice %2 {offsets = [0, 32], sizes = [2, 16], strides = [1, 1]} : vector<2x48xf32> to vector<2x16xf32>
    %c0_3 = arith.constant 0 : index
    %c0_4 = arith.constant 0 : index
    %6 = vector.load %arg3[%c0_3, %c0_4] : memref<48x640xf32, #tpu.memory_space<vmem>>, vector<48x640xf32>
    %cst_5 = arith.constant dense<0.000000e+00> : vector<2x640xf32>
    %7 = tpu.matmul %2, %6, %cst_5 {dimension_numbers = #tpu.dot_dimension_numbers<[1], [0], [0], [1], [0, 0, 1, 1], [], []>} : vector<2x48xf32>, vector<48x640xf32>, vector<2x640xf32> -> vector<2x640xf32>
    %8 = vector.extract_strided_slice %7 {offsets = [0, 0], sizes = [2, 128], strides = [1, 1]} : vector<2x640xf32> to vector<2x128xf32>
    %9 = math.cos %8 : vector<2x128xf32>
    %10 = vector.extract_strided_slice %7 {offsets = [0, 0], sizes = [2, 128], strides = [1, 1]} : vector<2x640xf32> to vector<2x128xf32>
    %11 = math.sin %10 : vector<2x128xf32>
    %c0_6 = arith.constant 0 : index
    %c0_7 = arith.constant 0 : index
    %12 = vector.load %arg4[%c0_6, %c0_7] : memref<2x128xf32, #tpu.memory_space<vmem>>, vector<1x128xf32>
    %13 = vector.extract_strided_slice %7 {offsets = [0, 128], sizes = [2, 128], strides = [1, 1]} : vector<2x640xf32> to vector<2x128xf32>
    %14 = vector.broadcast %12 : vector<1x128xf32> to vector<2x128xf32>
    %15 = arith.mulf %14, %13 : vector<2x128xf32>
    %c0_8 = arith.constant 0 : index
    %c0_9 = arith.constant 0 : index
    %16 = vector.load %arg4[%c0_8, %c0_9] : memref<2x128xf32, #tpu.memory_space<vmem>>, vector<1x128xf32>
    %17 = vector.extract_strided_slice %7 {offsets = [0, 384], sizes = [2, 128], strides = [1, 1]} : vector<2x640xf32> to vector<2x128xf32>
    %18 = vector.broadcast %16 : vector<1x128xf32> to vector<2x128xf32>
    %19 = arith.mulf %18, %17 : vector<2x128xf32>
    %c1 = arith.constant 1 : index
    %c0_10 = arith.constant 0 : index
    %20 = vector.load %arg4[%c1, %c0_10] : memref<2x128xf32, #tpu.memory_space<vmem>>, vector<1x128xf32>
    %21 = vector.extract_strided_slice %7 {offsets = [0, 256], sizes = [2, 128], strides = [1, 1]} : vector<2x640xf32> to vector<2x128xf32>
    %22 = vector.broadcast %20 : vector<1x128xf32> to vector<2x128xf32>
    %23 = arith.mulf %22, %21 : vector<2x128xf32>
    %24 = arith.addf %15, %23 : vector<2x128xf32>
    %25 = vector.extract_strided_slice %7 {offsets = [0, 512], sizes = [2, 128], strides = [1, 1]} : vector<2x640xf32> to vector<2x128xf32>
    %26 = vector.broadcast %20 : vector<1x128xf32> to vector<2x128xf32>
    %27 = arith.mulf %26, %25 : vector<2x128xf32>
    %28 = arith.addf %19, %27 : vector<2x128xf32>
    %29 = arith.mulf %9, %24 : vector<2x128xf32>
    %30 = arith.mulf %11, %28 : vector<2x128xf32>
    %31 = arith.subf %29, %30 : vector<2x128xf32>
    %32 = arith.mulf %9, %28 : vector<2x128xf32>
    %33 = arith.mulf %11, %24 : vector<2x128xf32>
    %34 = arith.addf %32, %33 : vector<2x128xf32>
    %35 = arith.mulf %31, %31 : vector<2x128xf32>
    %36 = arith.mulf %34, %34 : vector<2x128xf32>
    %37 = arith.addf %35, %36 : vector<2x128xf32>
    %c0_11 = arith.constant 0 : index
    %c0_12 = arith.constant 0 : index
    %38 = vector.load %arg5[%c0_11, %c0_12] : memref<128x4xf32, #tpu.memory_space<vmem>>, vector<128x4xf32>
    %cst_13 = arith.constant dense<0.000000e+00> : vector<2x4xf32>
    %39 = tpu.matmul %37, %38, %cst_13 {dimension_numbers = #tpu.dot_dimension_numbers<[1], [0], [0], [1], [0, 0, 1, 1], [], []>} : vector<2x128xf32>, vector<128x4xf32>, vector<2x4xf32> -> vector<2x4xf32>
    %40 = math.rsqrt %39 : vector<2x4xf32>
    %cst_14 = arith.constant 1.41421354 : f32
    %41 = vector.broadcast %cst_14 : f32 to vector<2x4xf32>
    %42 = arith.mulf %41, %40 : vector<2x4xf32>
    %c0_15 = arith.constant 0 : index
    %c0_16 = arith.constant 0 : index
    %43 = vector.load %arg6[%c0_15, %c0_16] : memref<4x16xf32, #tpu.memory_space<vmem>>, vector<4x16xf32>
    %cst_17 = arith.constant dense<0.000000e+00> : vector<2x16xf32>
    %44 = tpu.matmul %42, %43, %cst_17 {dimension_numbers = #tpu.dot_dimension_numbers<[1], [0], [0], [1], [0, 0, 1, 1], [], []>} : vector<2x4xf32>, vector<4x16xf32>, vector<2x16xf32> -> vector<2x16xf32>
    %45 = math.cos %3 : vector<2x16xf32>
    %c0_18 = arith.constant 0 : index
    %c0_19 = arith.constant 0 : index
    %46 = vector.load %arg7[%c0_18, %c0_19] : memref<2x16xf32, #tpu.memory_space<vmem>>, vector<2x16xf32>
    tpu.vector_store %arg7[%c0_18, %c0_19], %45 {strides = array<i32>} : memref<2x16xf32, #tpu.memory_space<vmem>>, vector<2x16xf32>,
    %47 = math.sin %3 : vector<2x16xf32>
    %c0_20 = arith.constant 0 : index
    %c0_21 = arith.constant 0 : index
    %48 = vector.load %arg8[%c0_20, %c0_21] : memref<2x16xf32, #tpu.memory_space<vmem>>, vector<2x16xf32>
    tpu.vector_store %arg8[%c0_20, %c0_21], %47 {strides = array<i32>} : memref<2x16xf32, #tpu.memory_space<vmem>>, vector<2x16xf32>,
    %49 = arith.mulf %4, %44 : vector<2x16xf32>
    %c0_22 = arith.constant 0 : index
    %c0_23 = arith.constant 0 : index
    %50 = vector.load %arg9[%c0_22, %c0_23] : memref<2x16xf32, #tpu.memory_space<vmem>>, vector<2x16xf32>
    tpu.vector_store %arg9[%c0_22, %c0_23], %49 {strides = array<i32>} : memref<2x16xf32, #tpu.memory_space<vmem>>, vector<2x16xf32>,
    %51 = arith.mulf %5, %44 : vector<2x16xf32>
    %c0_24 = arith.constant 0 : index
    %c0_25 = arith.constant 0 : index
    %52 = vector.load %arg10[%c0_24, %c0_25] : memref<2x16xf32, #tpu.memory_space<vmem>>, vector<2x16xf32>
    tpu.vector_store %arg10[%c0_24, %c0_25], %51 {strides = array<i32>} : memref<2x16xf32, #tpu.memory_space<vmem>>, vector<2x16xf32>,
    return
  }
  func.func @transform_0(%arg0: i32) -> (i32, i32) {
    %c0_i32 = arith.constant 0 : i32
    %c0_i32_0 = arith.constant 0 : i32
    return %arg0, %c0_i32 : i32, i32
  }
  func.func @transform_1(%arg0: i32) -> (i32, i32) {
    %c0_i32 = arith.constant 0 : i32
    %c0_i32_0 = arith.constant 0 : i32
    %c0_i32_1 = arith.constant 0 : i32
    return %c0_i32, %c0_i32_0 : i32, i32
  }
  func.func @transform_2(%arg0: i32) -> (i32, i32) {
    %c0_i32 = arith.constant 0 : i32
    %c0_i32_0 = arith.constant 0 : i32
    %c0_i32_1 = arith.constant 0 : i32
    return %c0_i32, %c0_i32_0 : i32, i32
  }
  func.func @transform_3(%arg0: i32) -> (i32, i32) {
    %c0_i32 = arith.constant 0 : i32
    %c0_i32_0 = arith.constant 0 : i32
    %c0_i32_1 = arith.constant 0 : i32
    return %c0_i32, %c0_i32_0 : i32, i32
  }
  func.func @transform_4(%arg0: i32) -> (i32, i32) {
    %c0_i32 = arith.constant 0 : i32
    %c0_i32_0 = arith.constant 0 : i32
    %c0_i32_1 = arith.constant 0 : i32
    return %c0_i32, %c0_i32_0 : i32, i32
  }
  func.func @transform_5(%arg0: i32) -> (i32, i32) {
    %c0_i32 = arith.constant 0 : i32
    %c0_i32_0 = arith.constant 0 : i32
    %c0_i32_1 = arith.constant 0 : i32
    return %c0_i32, %c0_i32_0 : i32, i32
  }
  func.func @transform_6(%arg0: i32) -> (i32, i32) {
    %c0_i32 = arith.constant 0 : i32
    %c0_i32_0 = arith.constant 0 : i32
    return %arg0, %c0_i32 : i32, i32
  }
  func.func @transform_7(%arg0: i32) -> (i32, i32) {
    %c0_i32 = arith.constant 0 : i32
    %c0_i32_0 = arith.constant 0 : i32
    return %arg0, %c0_i32 : i32, i32
  }
  func.func @transform_8(%arg0: i32) -> (i32, i32) {
    %c0_i32 = arith.constant 0 : i32
    %c0_i32_0 = arith.constant 0 : i32
    return %arg0, %c0_i32 : i32, i32
  }
  func.func @transform_9(%arg0: i32) -> (i32, i32) {
    %c0_i32 = arith.constant 0 : i32
    %c0_i32_0 = arith.constant 0 : i32
    return %arg0, %c0_i32 : i32, i32
  }
}

</mosaic_0001>

<llo_original>
// kernel: tpu_custom_call.1
$region0: #{tpu_custom_call.1}
  #allocation0 [shape = 'u32[]', space=smem, size = 0x4, offset = 0x4, fixed_abs, tag = 'smem constant byte address 0x4 - core index']
  #allocation1 [shape = 'u32[72,128]{1,0:T(1,128)}', space=vmem, size = 0x9000, scoped, tag = 'internal scratch']
  %s0 = inlined_call_operand.vmem [shape: f32[2,33], index: 0, kind: input, shape index: {}]
  %s1 = inlined_call_operand.vmem [shape: f32[33,48], index: 1, kind: input, shape index: {}]
  %s2 = inlined_call_operand.hbm [shape: f32[48,640], index: 2, kind: input, shape index: {}]
  %s3 = inlined_call_operand.vmem [shape: f32[2,128], index: 3, kind: input, shape index: {}]
  %s4 = inlined_call_operand.vmem [shape: f32[128,4], index: 4, kind: input, shape index: {}]
  %s5 = inlined_call_operand.vmem [shape: f32[4,16], index: 5, kind: input, shape index: {}]
  %s6 = inlined_call_operand.hbm [shape: f32[2,16], index: 6, kind: output, shape index: {0}]
  %s7 = inlined_call_operand.hbm [shape: f32[2,16], index: 7, kind: output, shape index: {1}]
  %s8 = inlined_call_operand.hbm [shape: f32[2,16], index: 8, kind: output, shape index: {2}]
  %s9 = inlined_call_operand.hbm [shape: f32[2,16], index: 9, kind: output, shape index: {3}]
  %10 = xla_tuple %s6, %s7, %s8, %s9
  %s11 = sld [smem:[#allocation0]]
  $region62: #{tpu_custom_call.1} parent=0
    _
  %s13 = ssub.s32 1, %s11
  %s14 = scalar_select 0, %s13, %s11
  $region1: #{tpu_custom_call.1} parent=0
    #allocation2 [shape = 'u8[122880]{0}', space=vmem, size = 0x1e000, scoped, tag = 'input window, operand 2, single buffered']
    #allocation3 [shape = 's32[1]{0}', space=sflag, size = 0x4, scoped, tag = 'scoped memory for tpu_custom_call.1']
    #allocation4 [shape = 's32[1]{0}', space=sflag, size = 0x4, scoped, tag = 'scoped memory for tpu_custom_call.1']
    #allocation5 [shape = 'u8[1024]{0}', space=vmem, size = 0x400, scoped, tag = 'output window, operand 0, single buffered']
    #allocation6 [shape = 'u8[1024]{0}', space=vmem, size = 0x400, scoped, tag = 'output window, operand 1, single buffered']
    #allocation7 [shape = 's32[1]{0}', space=sflag, size = 0x4, scoped, tag = 'scoped memory for tpu_custom_call.1']
    #allocation8 [shape = 'u8[1024]{0}', space=vmem, size = 0x400, scoped, tag = 'output window, operand 2, single buffered']
    #allocation9 [shape = 'u8[1024]{0}', space=vmem, size = 0x400, scoped, tag = 'output window, operand 3, single buffered']
    #allocation10 [shape = 's32[1]{0}', space=sflag, size = 0x4, scoped, tag = 'scoped memory for tpu_custom_call.1']
    %15 = vsyncpa [#allocation3], 0
    %16 = vsyncpa [#allocation4], 0
    %17 = vsyncpa [#allocation7], 0
    %18 = vsyncpa [#allocation10], 0
    // Predicated region
    $region2: #{tpu_custom_call.1} parent=1 // pred_check
      _
    $region3: #{tpu_custom_call.1} parent=1 // pred_check_branch
      %20 = sbr.rel (0) target = $region5
    $region4: #{tpu_custom_call.1} parent=1 // pred_region
      _
    $region5: #{tpu_custom_call.1} parent=1 // pred_fallthru
      _
    // Predicated region
    $region6: #{tpu_custom_call.1} parent=1 // pred_check
      _
    $region7: #{tpu_custom_call.1} parent=1 // pred_check_branch
      %22 = sbr.rel (0) target = $region9
    $region8: #{tpu_custom_call.1} parent=1 // pred_region
      _
    $region9: #{tpu_custom_call.1} parent=1 // pred_fallthru
      _
    // Predicated region
    $region10: #{tpu_custom_call.1} parent=1 // pred_check
      _
    $region11: #{tpu_custom_call.1} parent=1 // pred_check_branch
      %24 = sbr.rel (0) target = $region13
    $region12: #{tpu_custom_call.1} parent=1 // pred_region
      %26 = vsyncadd [#allocation3], 0
      %s27 = sshll.u32 %s2, 4
      %s28 = int_to_ptr.hbm [resolvable:$true] %s27
      %s29 = sshll.u32 [#allocation2], 4
      %s30 = int_to_ptr.vmem [resolvable:$true] %s29
      %35 = dma.hbm_to_vmem [thread:$0]  %s28, 3840, %s30, [#allocation3], 640, 640, 40
    $region13: #{tpu_custom_call.1} parent=1 // pred_fallthru
      _
    // Predicated region
    $region14: #{tpu_custom_call.1} parent=1 // pred_check
      _
    $region15: #{tpu_custom_call.1} parent=1 // pred_check_branch
      %37 = sbr.rel (0) target = $region17
    $region16: #{tpu_custom_call.1} parent=1 // pred_region
      _
    $region17: #{tpu_custom_call.1} parent=1 // pred_fallthru
      _
    // Predicated region
    $region18: #{tpu_custom_call.1} parent=1 // pred_check
      _
    $region19: #{tpu_custom_call.1} parent=1 // pred_check_branch
      %39 = sbr.rel (0) target = $region21
    $region20: #{tpu_custom_call.1} parent=1 // pred_region
      _
    $region21: #{tpu_custom_call.1} parent=1 // pred_fallthru
      _
    // Predicated region
    $region22: #{tpu_custom_call.1} parent=1 // pred_check
      _
    $region23: #{tpu_custom_call.1} parent=1 // pred_check_branch
      %41 = sbr.rel (0) target = $region25
    $region24: #{tpu_custom_call.1} parent=1 // pred_region
      _
    $region25: #{tpu_custom_call.1} parent=1 // pred_fallthru
      _
    // Predicated region
    $region26: #{tpu_custom_call.1} parent=1 // pred_check
      _
    $region27: #{tpu_custom_call.1} parent=1 // pred_check_branch
      %43 = sbr.rel (0) target = $region29
    $region28: #{tpu_custom_call.1} parent=1 // pred_region
      %45 = dma.done [#allocation3], 3840
    $region29: #{tpu_custom_call.1} parent=1 // pred_fallthru
      _
    %v46 = vld [vmem:[%s0] sm:$0x3]
    %v47 = vld [vmem:[%s1] sm:$0xff]
    %v48 = vld [vmem:[%s1 + $0x8] sm:$0xff]
    %v49 = vld [vmem:[%s1 + $0x10] sm:$0xff]
    %v50 = vld [vmem:[%s1 + $0x18] sm:$0xff]
    %v51 = vld [vmem:[%s1 + $0x20] sm:$0x1]
    %vm52 = vcmask 269312
    %v54 = vsel %vm52, %v46, 0
    %vm56 = vcmask 1040384
    %v58 = vsel %vm56, %v51, 0
    %60 = vmatpush.msra.mxu0 0.0
    %61 = vmatpush.msra.mxu0 0.0
    %62 = vmatpush.msra.mxu0 0.0
    %63 = vmatpush.msra.mxu0 0.0
    %64 = vmatpush.msra.mxu0 0.0
    %65 = vmatpush.msra.mxu0 0.0
    %66 = vmatpush.msra.mxu0 0.0
    %67 = vmatpush.msra.mxu0 0.0
    %68 = vmatpush.msra.mxu0 0.0
    %69 = vmatpush.msra.mxu0 0.0
    %70 = vmatpush.msra.mxu0 0.0
    %71 = vmatpush.msra.mxu0 %v58
    %72 = vmatpush.msra.mxu0 %v50
    %73 = vmatpush.msra.mxu0 %v49
    %74 = vmatpush.msra.mxu0 %v48
    %75 = vmatpush.msra.mxu0 %v47
    %76 = vmatmul.f32.gmra.mxu0 %v54
    %v77 = vpop.f32.mrf.mxu0
    %v78 = vadd.f32 0.0, %v77
    %79 = vdwg.mxu0
    %v80 = vld [vmem:[#allocation2] sm:$0xff]
    %v81 = vld [vmem:[#allocation2 + $0x8] sm:$0xff]
    %v82 = vld [vmem:[#allocation2 + $0x10] sm:$0xff]
    %v83 = vld [vmem:[#allocation2 + $0x18] sm:$0xff]
    %v84 = vld [vmem:[#allocation2 + $0x20] sm:$0xff]
    %v85 = vld [vmem:[#allocation2 + $0x28] sm:$0xff]
    %v86 = vld [vmem:[#allocation2 + $0x30] sm:$0xff]
    %v87 = vld [vmem:[#allocation2 + $0x38] sm:$0xff]
    %v88 = vld [vmem:[#allocation2 + $0x40] sm:$0xff]
    %v89 = vld [vmem:[#allocation2 + $0x48] sm:$0xff]
    %v90 = vld [vmem:[#allocation2 + $0x50] sm:$0xff]
    %v91 = vld [vmem:[#allocation2 + $0x58] sm:$0xff]
    %v92 = vld [vmem:[#allocation2 + $0x60] sm:$0xff]
    %v93 = vld [vmem:[#allocation2 + $0x68] sm:$0xff]
    %v94 = vld [vmem:[#allocation2 + $0x70] sm:$0xff]
    %v95 = vld [vmem:[#allocation2 + $0x78] sm:$0xff]
    %v96 = vld [vmem:[#allocation2 + $0x80] sm:$0xff]
    %v97 = vld [vmem:[#allocation2 + $0x88] sm:$0xff]
    %v98 = vld [vmem:[#allocation2 + $0x90] sm:$0xff]
    %v99 = vld [vmem:[#allocation2 + $0x98] sm:$0xff]
    %v100 = vld [vmem:[#allocation2 + $0xa0] sm:$0xff]
    %v101 = vld [vmem:[#allocation2 + $0xa8] sm:$0xff]
    %v102 = vld [vmem:[#allocation2 + $0xb0] sm:$0xff]
    %v103 = vld [vmem:[#allocation2 + $0xb8] sm:$0xff]
    %v104 = vld [vmem:[#allocation2 + $0xc0] sm:$0xff]
    %v105 = vld [vmem:[#allocation2 + $0xc8] sm:$0xff]
    %v106 = vld [vmem:[#allocation2 + $0xd0] sm:$0xff]
    %v107 = vld [vmem:[#allocation2 + $0xd8] sm:$0xff]
    %v108 = vld [vmem:[#allocation2 + $0xe0] sm:$0xff]
    %v109 = vld [vmem:[#allocation2 + $0xe8] sm:$0xff]
    %vm110 = vcmask 392192
    %v112 = vsel %vm110, %v78, 0
    %114 = vmatpush.msra.mxu0 0.0
    %115 = vmatpush.msra.mxu0 0.0
    %116 = vmatpush.msra.mxu0 0.0
    %117 = vmatpush.msra.mxu0 0.0
    %118 = vmatpush.msra.mxu0 0.0
    %119 = vmatpush.msra.mxu0 0.0
    %120 = vmatpush.msra.mxu0 0.0
    %121 = vmatpush.msra.mxu0 0.0
    %122 = vmatpush.msra.mxu0 0.0
    %123 = vmatpush.msra.mxu0 0.0
    %124 = vmatpush.msra.mxu0 %v105
    %125 = vmatpush.msra.mxu0 %v100
    %126 = vmatpush.msra.mxu0 %v95
    %127 = vmatpush.msra.mxu0 %v90
    %128 = vmatpush.msra.mxu0 %v85
    %129 = vmatpush.msra.mxu0 %v80
    %130 = vmatmul.f32.gmra.mxu0 %v112
    %v131 = vpop.f32.mrf.mxu0
    %v132 = vadd.f32 0.0, %v131
    %133 = vdwg.mxu0
    %134 = vmatpush.msra.mxu0 0.0
    %135 = vmatpush.msra.mxu0 0.0
    %136 = vmatpush.msra.mxu0 0.0
    %137 = vmatpush.msra.mxu0 0.0
    %138 = vmatpush.msra.mxu0 0.0
    %139 = vmatpush.msra.mxu0 0.0
    %140 = vmatpush.msra.mxu0 0.0
    %141 = vmatpush.msra.mxu0 0.0
    %142 = vmatpush.msra.mxu0 0.0
    %143 = vmatpush.msra.mxu0 0.0
    %144 = vmatpush.msra.mxu0 %v106
    %145 = vmatpush.msra.mxu0 %v101
    %146 = vmatpush.msra.mxu0 %v96
    %147 = vmatpush.msra.mxu0 %v91
    %148 = vmatpush.msra.mxu0 %v86
    %149 = vmatpush.msra.mxu0 %v81
    %150 = vmatmul.f32.gmra.mxu0 %v112
    %v151 = vpop.f32.mrf.mxu0
    %v152 = vadd.f32 0.0, %v151
    %153 = vdwg.mxu0
    %154 = vmatpush.msra.mxu0 0.0
    %155 = vmatpush.msra.mxu0 0.0
    %156 = vmatpush.msra.mxu0 0.0
    %157 = vmatpush.msra.mxu0 0.0
    %158 = vmatpush.msra.mxu0 0.0
    %159 = vmatpush.msra.mxu0 0.0
    %160 = vmatpush.msra.mxu0 0.0
    %161 = vmatpush.msra.mxu0 0.0
    %162 = vmatpush.msra.mxu0 0.0
    %163 = vmatpush.msra.mxu0 0.0
    %164 = vmatpush.msra.mxu0 %v107
    %165 = vmatpush.msra.mxu0 %v102
    %166 = vmatpush.msra.mxu0 %v97
    %167 = vmatpush.msra.mxu0 %v92
    %168 = vmatpush.msra.mxu0 %v87
    %169 = vmatpush.msra.mxu0 %v82
    %170 = vmatmul.f32.gmra.mxu0 %v112
    %v171 = vpop.f32.mrf.mxu0
    %v172 = vadd.f32 0.0, %v171
    %173 = vdwg.mxu0
    %174 = vmatpush.msra.mxu0 0.0
    %175 = vmatpush.msra.mxu0 0.0
    %176 = vmatpush.msra.mxu0 0.0
    %177 = vmatpush.msra.mxu0 0.0
    %178 = vmatpush.msra.mxu0 0.0
    %179 = vmatpush.msra.mxu0 0.0
    %180 = vmatpush.msra.mxu0 0.0
    %181 = vmatpush.msra.mxu0 0.0
    %182 = vmatpush.msra.mxu0 0.0
    %183 = vmatpush.msra.mxu0 0.0
    %184 = vmatpush.msra.mxu0 %v108
    %185 = vmatpush.msra.mxu0 %v103
    %186 = vmatpush.msra.mxu0 %v98
    %187 = vmatpush.msra.mxu0 %v93
    %188 = vmatpush.msra.mxu0 %v88
    %189 = vmatpush.msra.mxu0 %v83
    %190 = vmatmul.f32.gmra.mxu0 %v112
    %v191 = vpop.f32.mrf.mxu0
    %v192 = vadd.f32 0.0, %v191
    %193 = vdwg.mxu0
    %194 = vmatpush.msra.mxu0 0.0
    %195 = vmatpush.msra.mxu0 0.0
    %196 = vmatpush.msra.mxu0 0.0
    %197 = vmatpush.msra.mxu0 0.0
    %198 = vmatpush.msra.mxu0 0.0
    %199 = vmatpush.msra.mxu0 0.0
    %200 = vmatpush.msra.mxu0 0.0
    %201 = vmatpush.msra.mxu0 0.0
    %202 = vmatpush.msra.mxu0 0.0
    %203 = vmatpush.msra.mxu0 0.0
    %204 = vmatpush.msra.mxu0 %v109
    %205 = vmatpush.msra.mxu0 %v104
    %206 = vmatpush.msra.mxu0 %v99
    %207 = vmatpush.msra.mxu0 %v94
    %208 = vmatpush.msra.mxu0 %v89
    %209 = vmatpush.msra.mxu0 %v84
    %210 = vmatmul.f32.gmra.mxu0 %v112
    %v211 = vpop.f32.mrf.mxu0
    %v212 = vadd.f32 0.0, %v211
    %213 = vdwg.mxu0
    %v214 = vand.u32 2147483647, %v132
    %vm215 = vcmp.le.f32.partialorder %v214, 0.7853982
    %vm216 = vcmp.lt.s32.totalorder %v132, 0
    %v217 = vand.u32 %v132, 2139095040
    %v218 = vshrl.u32 %v217, 23
    %v219 = vsub.s32 %v218, 127
    %v220 = vand.u32 2147483647, %v132
    %v221 = vand.u32 %v220, 8388607
    %v222 = vor.u32 %v221, 8388608
    %v223 = vsub.s32 0, %v222
    %v224 = vadd.s32 %v219, 1
    %vm225 = vcmp.gt.s32.totalorder %v224, 0
    %v226 = vsel %vm225, %v224, 0
    %v227 = vshrl.u32 %v226, 5
    %v228 = vand.u32 %v226, 31
    %v229 = vsub.s32 32, %v228
    %v230 = vshrl.u32 683565275, %v229
    %v231 = vshll.u32 683565275, %v228
    %v232 = vshrl.u32 2475754826, %v229
    %v233 = vor.u32 %v231, %v232
    %v234 = vshll.u32 2475754826, %v228
    %v235 = vshrl.u32 2131351028, %v229
    %v236 = vor.u32 %v234, %v235
    %v237 = vshll.u32 2131351028, %v228
    %v238 = vshrl.u32 2102212464, %v229
    %v239 = vor.u32 %v237, %v238
    %v240 = vshll.u32 2102212464, %v228
    %v241 = vshrl.u32 920167782, %v229
    %v242 = vor.u32 %v240, %v241
    %v243 = vshll.u32 920167782, %v228
    %v244 = vshrl.u32 1326507024, %v229
    %v245 = vor.u32 %v243, %v244
    %vm246 = vcmp.lt.s32.totalorder %v227, 1
    %vm247 = vcmp.lt.s32.totalorder %v227, 2
    %vm248 = vcmp.lt.s32.totalorder %v227, 3
    %vm249 = vcmp.lt.s32.totalorder %v227, 4
    %v250 = vsel %vm246, %v230, %v233
    %v251 = vsel %vm249, %v239, 2102212464
    %v252 = vsel %vm248, %v236, %v251
    %v253 = vsel %vm247, %v250, %v252
    %v254 = vsel %vm246, %v233, %v236
    %v255 = vsel %vm249, %v242, 920167782
    %v256 = vsel %vm248, %v239, %v255
    %v257 = vsel %vm247, %v254, %v256
    %v258 = vsel %vm246, %v236, %v239
    %v259 = vsel %vm249, %v245, 1326507024
    %v260 = vsel %vm248, %v242, %v259
    %v261 = vsel %vm247, %v258, %v260
    %v262 = vshll.u32 %v222, 8
    %v263 = vand.u32 %v262, 65535
    %v264 = vshrl.u32 %v262, 16
    %v265 = vand.u32 %v261, 65535
    %v266 = vshrl.u32 %v261, 16
    %v267 = vmul.u32 %v263, %v265
    %v268 = vmul.u32 %v263, %v266
    %v269 = vmul.u32 %v264, %v265
    %v270 = vmul.u32 %v264, %v266
    %v271 = vshll.u32 %v268, 16
    %v272 = vshrl.u32 %v268, 16
    %v273 = vshll.u32 %v269, 16
    %v274 = vshrl.u32 %v269, 16
    %vm275 = vc.u32 %v267, %v271
    %v276 = vsel %vm275, 1, 0
    %v277 = vadd.s32 %v267, %v271
    %v278 = vadd.s32 %v270, %v276
    %vm279 = vc.u32 %v277, %v273
    %v280 = vsel %vm279, 1, 0
    %v281 = vadd.s32 %v277, %v273
    %v282 = vadd.s32 %v278, %v280
    %v283 = vadd.s32 %v282, %v272
    %v284 = vadd.s32 %v283, %v274
    %v285 = vand.u32 %v262, 65535
    %v286 = vshrl.u32 %v262, 16
    %v287 = vand.u32 %v257, 65535
    %v288 = vshrl.u32 %v257, 16
    %v289 = vmul.u32 %v285, %v287
    %v290 = vmul.u32 %v285, %v288
    %v291 = vmul.u32 %v286, %v287
    %v292 = vmul.u32 %v286, %v288
    %v293 = vshll.u32 %v290, 16
    %v294 = vshrl.u32 %v290, 16
    %v295 = vshll.u32 %v291, 16
    %v296 = vshrl.u32 %v291, 16
    %vm297 = vc.u32 %v289, %v293
    %v298 = vsel %vm297, 1, 0
    %v299 = vadd.s32 %v289, %v293
    %v300 = vadd.s32 %v292, %v298
    %vm301 = vc.u32 %v299, %v295
    %v302 = vsel %vm301, 1, 0
    %v303 = vadd.s32 %v299, %v295
    %v304 = vadd.s32 %v300, %v302
    %v305 = vadd.s32 %v304, %v294
    %v306 = vadd.s32 %v305, %v296
    %v307 = vmul.u32 %v262, %v253
    %v308 = vadd.s32 %v284, %v303
    %vm309 = vc.u32 %v284, %v303
    %v310 = vadd.s32 %v306, 1
    %v311 = vsel %vm309, %v310, %v306
    %v312 = vadd.s32 %v307, %v311
    %v313 = vadd.s32 %v312, 536870912
    %v314 = vshrl.u32 %v313, 30
    %v315 = vshll.u32 %v314, 30
    %v316 = vsub.s32 %v312, %v315
    %vm317 = vcmp.lt.s32.totalorder %v316, 0
    %v318 = vsub.s32 0, %v316
    %v319 = vsel %vm317, %v318, %v316
    %v320 = vclz %v319
    %v321 = vsub.s32 %v320, 2
    %vm322 = vcmp.gt.s32.totalorder 0, %v321
    %v323 = vsel %vm322, 0, %v321
    %v324 = vsub.s32 32, %v323
    %v325 = vshll.u32 %v316, %v323
    %v326 = vshrl.u32 %v308, %v324
    %v327 = vor.u32 %v325, %v326
    %v328 = vsub.s32 4294967266, %v323
    %v329 = vadd.s32 %v328, 127
    %v330 = vshll.u32 %v329, 23
    %v331 = vor.u32 4788187, %v330
    %v332 = vand.u32 2147483647, %v331
    %v334 = vcvt.s32.f32 %v327
    %v335 = vmul.f32 %v334, %v332
    %v336 = vxor.u32 %v335, 2147483648
    %v337 = vsel %vm216, %v336, %v335
    %v338 = vsub.s32 4, %v314
    %v339 = vsel %vm216, %v338, %v314
    %v340 = vsel %vm215, %v132, %v337
    %v341 = vsel %vm215, 0, %v339
    %v342 = vmul.f32 %v340, %v340
    %v343 = vmul.f32 %v342, -0.001358992
    %v344 = vadd.f32 %v343, 0.041655596
    %v345 = vmul.f32 %v342, %v344
    %v346 = vadd.f32 %v345, -0.4999988
    %v347 = vmul.f32 %v342, %v346
    %v348 = vadd.f32 1.0, %v347
    %v349 = vmul.f32 %v340, %v340
    %v350 = vmul.f32 %v349, -0.00019511016
    %v351 = vadd.f32 %v350, 0.008332121
    %v352 = vmul.f32 %v349, %v351
    %v353 = vadd.f32 %v352, -0.16666654
    %v354 = vmul.f32 %v349, %v353
    %v355 = vadd.f32 %v354, 1.0
    %v356 = vmul.f32 %v355, %v340
    %vm357 = vweird.f32 %v132
    %v358 = vand.u32 %v341, 3
    %vm359 = vcmp.lt.s32.totalorder %v358, 2
    %vm360 = vcmp.eq.s32.totalorder %v358, 0
    %v361 = vxor.u32 %v356, 2147483648
    %v362 = vsel %vm360, %v348, %v361
    %vm363 = vcmp.eq.s32.totalorder %v358, 2
    %v364 = vxor.u32 %v348, 2147483648
    %v365 = vsel %vm363, %v364, %v356
    %v366 = vsel %vm359, %v362, %v365
    %v367 = vsel %vm357, nan, %v366
    %v368 = vand.u32 2147483647, %v132
    %vm369 = vcmp.le.f32.partialorder %v368, 0.7853982
    %vm370 = vcmp.lt.s32.totalorder %v132, 0
    %v371 = vand.u32 %v132, 2139095040
    %v372 = vshrl.u32 %v371, 23
    %v373 = vsub.s32 %v372, 127
    %v374 = vand.u32 2147483647, %v132
    %v375 = vand.u32 %v374, 8388607
    %v376 = vor.u32 %v375, 8388608
    %v377 = vsub.s32 0, %v376
    %v378 = vadd.s32 %v373, 1
    %vm379 = vcmp.gt.s32.totalorder %v378, 0
    %v380 = vsel %vm379, %v378, 0
    %v381 = vshrl.u32 %v380, 5
    %v382 = vand.u32 %v380, 31
    %v383 = vsub.s32 32, %v382
    %v384 = vshrl.u32 683565275, %v383
    %v385 = vshll.u32 683565275, %v382
    %v386 = vshrl.u32 2475754826, %v383
    %v387 = vor.u32 %v385, %v386
    %v388 = vshll.u32 2475754826, %v382
    %v389 = vshrl.u32 2131351028, %v383
    %v390 = vor.u32 %v388, %v389
    %v391 = vshll.u32 2131351028, %v382
    %v392 = vshrl.u32 2102212464, %v383
    %v393 = vor.u32 %v391, %v392
    %v394 = vshll.u32 2102212464, %v382
    %v395 = vshrl.u32 920167782, %v383
    %v396 = vor.u32 %v394, %v395
    %v397 = vshll.u32 920167782, %v382
    %v398 = vshrl.u32 1326507024, %v383
    %v399 = vor.u32 %v397, %v398
    %vm400 = vcmp.lt.s32.totalorder %v381, 1
    %vm401 = vcmp.lt.s32.totalorder %v381, 2
    %vm402 = vcmp.lt.s32.totalorder %v381, 3
    %vm403 = vcmp.lt.s32.totalorder %v381, 4
    %v404 = vsel %vm400, %v384, %v387
    %v405 = vsel %vm403, %v393, 2102212464
    %v406 = vsel %vm402, %v390, %v405
    %v407 = vsel %vm401, %v404, %v406
    %v408 = vsel %vm400, %v387, %v390
    %v409 = vsel %vm403, %v396, 920167782
    %v410 = vsel %vm402, %v393, %v409
    %v411 = vsel %vm401, %v408, %v410
    %v412 = vsel %vm400, %v390, %v393
    %v413 = vsel %vm403, %v399, 1326507024
    %v414 = vsel %vm402, %v396, %v413
    %v415 = vsel %vm401, %v412, %v414
    %v416 = vshll.u32 %v376, 8
    %v417 = vand.u32 %v416, 65535
    %v418 = vshrl.u32 %v416, 16
    %v419 = vand.u32 %v415, 65535
    %v420 = vshrl.u32 %v415, 16
    %v421 = vmul.u32 %v417, %v419
    %v422 = vmul.u32 %v417, %v420
    %v423 = vmul.u32 %v418, %v419
    %v424 = vmul.u32 %v418, %v420
    %v425 = vshll.u32 %v422, 16
    %v426 = vshrl.u32 %v422, 16
    %v427 = vshll.u32 %v423, 16
    %v428 = vshrl.u32 %v423, 16
    %vm429 = vc.u32 %v421, %v425
    %v430 = vsel %vm429, 1, 0
    %v431 = vadd.s32 %v421, %v425
    %v432 = vadd.s32 %v424, %v430
    %vm433 = vc.u32 %v431, %v427
    %v434 = vsel %vm433, 1, 0
    %v435 = vadd.s32 %v431, %v427
    %v436 = vadd.s32 %v432, %v434
    %v437 = vadd.s32 %v436, %v426
    %v438 = vadd.s32 %v437, %v428
    %v439 = vand.u32 %v416, 65535
    %v440 = vshrl.u32 %v416, 16
    %v441 = vand.u32 %v411, 65535
    %v442 = vshrl.u32 %v411, 16
    %v443 = vmul.u32 %v439, %v441
    %v444 = vmul.u32 %v439, %v442
    %v445 = vmul.u32 %v440, %v441
    %v446 = vmul.u32 %v440, %v442
    %v447 = vshll.u32 %v444, 16
    %v448 = vshrl.u32 %v444, 16
    %v449 = vshll.u32 %v445, 16
    %v450 = vshrl.u32 %v445, 16
    %vm451 = vc.u32 %v443, %v447
    %v452 = vsel %vm451, 1, 0
    %v453 = vadd.s32 %v443, %v447
    %v454 = vadd.s32 %v446, %v452
    %vm455 = vc.u32 %v453, %v449
    %v456 = vsel %vm455, 1, 0
    %v457 = vadd.s32 %v453, %v449
    %v458 = vadd.s32 %v454, %v456
    %v459 = vadd.s32 %v458, %v448
    %v460 = vadd.s32 %v459, %v450
    %v461 = vmul.u32 %v416, %v407
    %v462 = vadd.s32 %v438, %v457
    %vm463 = vc.u32 %v438, %v457
    %v464 = vadd.s32 %v460, 1
    %v465 = vsel %vm463, %v464, %v460
    %v466 = vadd.s32 %v461, %v465
    %v467 = vadd.s32 %v466, 536870912
    %v468 = vshrl.u32 %v467, 30
    %v469 = vshll.u32 %v468, 30
    %v470 = vsub.s32 %v466, %v469
    %vm471 = vcmp.lt.s32.totalorder %v470, 0
    %v472 = vsub.s32 0, %v470
    %v473 = vsel %vm471, %v472, %v470
    %v474 = vclz %v473
    %v475 = vsub.s32 %v474, 2
    %vm476 = vcmp.gt.s32.totalorder 0, %v475
    %v477 = vsel %vm476, 0, %v475
    %v478 = vsub.s32 32, %v477
    %v479 = vshll.u32 %v470, %v477
    %v480 = vshrl.u32 %v462, %v478
    %v481 = vor.u32 %v479, %v480
    %v482 = vsub.s32 4294967266, %v477
    %v483 = vadd.s32 %v482, 127
    %v484 = vshll.u32 %v483, 23
    %v485 = vor.u32 4788187, %v484
    %v486 = vand.u32 2147483647, %v485
    %v488 = vcvt.s32.f32 %v481
    %v489 = vmul.f32 %v488, %v486
    %v490 = vxor.u32 %v489, 2147483648
    %v491 = vsel %vm370, %v490, %v489
    %v492 = vsub.s32 4, %v468
    %v493 = vsel %vm370, %v492, %v468
    %v494 = vsel %vm369, %v132, %v491
    %v495 = vsel %vm369, 0, %v493
    %v496 = vmul.f32 %v494, %v494
    %v497 = vmul.f32 %v496, -0.001358992
    %v498 = vadd.f32 %v497, 0.041655596
    %v499 = vmul.f32 %v496, %v498
    %v500 = vadd.f32 %v499, -0.4999988
    %v501 = vmul.f32 %v496, %v500
    %v502 = vadd.f32 1.0, %v501
    %v503 = vmul.f32 %v494, %v494
    %v504 = vmul.f32 %v503, -0.00019511016
    %v505 = vadd.f32 %v504, 0.008332121
    %v506 = vmul.f32 %v503, %v505
    %v507 = vadd.f32 %v506, -0.16666654
    %v508 = vmul.f32 %v503, %v507
    %v509 = vadd.f32 %v508, 1.0
    %v510 = vmul.f32 %v509, %v494
    %vm511 = vweird.f32 %v132
    %v512 = vadd.s32 %v495, 3
    %v513 = vand.u32 %v512, 3
    %vm514 = vcmp.lt.s32.totalorder %v513, 2
    %vm515 = vcmp.eq.s32.totalorder %v513, 0
    %v516 = vxor.u32 %v510, 2147483648
    %v517 = vsel %vm515, %v502, %v516
    %vm518 = vcmp.eq.s32.totalorder %v513, 2
    %v519 = vxor.u32 %v502, 2147483648
    %v520 = vsel %vm518, %v519, %v510
    %v521 = vsel %vm514, %v517, %v520
    %v522 = vsel %vm511, nan, %v521
    %v523 = vld [vmem:[%s3] sm:$0x1]
    %v524 = vperm.slane %v523, 0
    %v525 = vmul.f32 %v524, %v152
    %v526 = vmul.f32 %v524, %v192
    %v527 = vld [vmem:[%s3 + $0x1] sm:$0x1]
    %v528 = vperm.slane %v527, 0
    %v529 = vmul.f32 %v528, %v172
    %v530 = vadd.f32 %v525, %v529
    %v531 = vmul.f32 %v528, %v212
    %v532 = vadd.f32 %v526, %v531
    %v533 = vmul.f32 %v367, %v530
    %v534 = vmul.f32 %v522, %v532
    %v535 = vsub.f32 %v533, %v534
    %v536 = vmul.f32 %v367, %v532
    %v537 = vmul.f32 %v522, %v530
    %v538 = vadd.f32 %v536, %v537
    %v539 = vmul.f32 %v535, %v535
    %v540 = vmul.f32 %v538, %v538
    %v541 = vadd.f32 %v539, %v540
    %v542 = vld [vmem:[%s4] sm:$0xff]
    %v543 = vld [vmem:[%s4 + $0x8] sm:$0xff]
    %v544 = vld [vmem:[%s4 + $0x10] sm:$0xff]
    %v545 = vld [vmem:[%s4 + $0x18] sm:$0xff]
    %v546 = vld [vmem:[%s4 + $0x20] sm:$0xff]
    %v547 = vld [vmem:[%s4 + $0x28] sm:$0xff]
    %v548 = vld [vmem:[%s4 + $0x30] sm:$0xff]
    %v549 = vld [vmem:[%s4 + $0x38] sm:$0xff]
    %v550 = vld [vmem:[%s4 + $0x40] sm:$0xff]
    %v551 = vld [vmem:[%s4 + $0x48] sm:$0xff]
    %v552 = vld [vmem:[%s4 + $0x50] sm:$0xff]
    %v553 = vld [vmem:[%s4 + $0x58] sm:$0xff]
    %v554 = vld [vmem:[%s4 + $0x60] sm:$0xff]
    %v555 = vld [vmem:[%s4 + $0x68] sm:$0xff]
    %v556 = vld [vmem:[%s4 + $0x70] sm:$0xff]
    %v557 = vld [vmem:[%s4 + $0x78] sm:$0xff]
    %558 = vmatpush.msra.mxu0 %v557
    %559 = vmatpush.msra.mxu0 %v556
    %560 = vmatpush.msra.mxu0 %v555
    %561 = vmatpush.msra.mxu0 %v554
    %562 = vmatpush.msra.mxu0 %v553
    %563 = vmatpush.msra.mxu0 %v552
    %564 = vmatpush.msra.mxu0 %v551
    %565 = vmatpush.msra.mxu0 %v550
    %566 = vmatpush.msra.mxu0 %v549
    %567 = vmatpush.msra.mxu0 %v548
    %568 = vmatpush.msra.mxu0 %v547
    %569 = vmatpush.msra.mxu0 %v546
    %570 = vmatpush.msra.mxu0 %v545
    %571 = vmatpush.msra.mxu0 %v544
    %572 = vmatpush.msra.mxu0 %v543
    %573 = vmatpush.msra.mxu0 %v542
    %574 = vmatmul.f32.gmra.mxu0 %v541
    %v575 = vpop.f32.mrf.mxu0
    %v576 = vadd.f32 0.0, %v575
    %577 = vdwg.mxu0
    %v578 = vrsqrt.pop %v576
    %v579 = vmul.f32 %v578, %v576
    %v580 = vmul.f32 %v579, %v578
    %v581 = vmul.f32 0.5, %v580
    %v582 = vsub.f32 1.5, %v581
    %v583 = vmul.f32 %v578, %v582
    %vm584 = vweird.f32 %v576
    %vm585 = vweird.f32 %v578
    %vm586 = vmor %vm584, %vm585
    %v587 = vsel %vm586, %v578, %v583
    %v588 = vmul.f32 %v587, 1.4142135
    %v589 = vld [vmem:[%s5] sm:$0xf]
    %vm590 = vcmask 31744
    %v592 = vsel %vm590, %v588, 0
    %vm594 = vcmask 1043456
    %v596 = vsel %vm594, %v589, 0
    %598 = vmatpush.msra.mxu0 0.0
    %599 = vmatpush.msra.mxu0 0.0
    %600 = vmatpush.msra.mxu0 0.0
    %601 = vmatpush.msra.mxu0 0.0
    %602 = vmatpush.msra.mxu0 0.0
    %603 = vmatpush.msra.mxu0 0.0
    %604 = vmatpush.msra.mxu0 0.0
    %605 = vmatpush.msra.mxu0 0.0
    %606 = vmatpush.msra.mxu0 0.0
    %607 = vmatpush.msra.mxu0 0.0
    %608 = vmatpush.msra.mxu0 0.0
    %609 = vmatpush.msra.mxu0 0.0
    %610 = vmatpush.msra.mxu0 0.0
    %611 = vmatpush.msra.mxu0 0.0
    %612 = vmatpush.msra.mxu0 0.0
    %613 = vmatpush.msra.mxu0 %v596
    %614 = vmatmul.f32.gmra.mxu0 %v592
    %v615 = vpop.f32.mrf.mxu0
    %v616 = vadd.f32 0.0, %v615
    %617 = vdwg.mxu0
    %v618 = vand.u32 2147483647, %v78
    %vm619 = vcmp.le.f32.partialorder %v618, 0.7853982
    %vm620 = vcmp.lt.s32.totalorder %v78, 0
    %v621 = vand.u32 %v78, 2139095040
    %v622 = vshrl.u32 %v621, 23
    %v623 = vsub.s32 %v622, 127
    %v624 = vand.u32 2147483647, %v78
    %v625 = vand.u32 %v624, 8388607
    %v626 = vor.u32 %v625, 8388608
    %v627 = vsub.s32 0, %v626
    %v628 = vadd.s32 %v623, 1
    %vm629 = vcmp.gt.s32.totalorder %v628, 0
    %v630 = vsel %vm629, %v628, 0
    %v631 = vshrl.u32 %v630, 5
    %v632 = vand.u32 %v630, 31
    %v633 = vsub.s32 32, %v632
    %v634 = vshrl.u32 683565275, %v633
    %v635 = vshll.u32 683565275, %v632
    %v636 = vshrl.u32 2475754826, %v633
    %v637 = vor.u32 %v635, %v636
    %v638 = vshll.u32 2475754826, %v632
    %v639 = vshrl.u32 2131351028, %v633
    %v640 = vor.u32 %v638, %v639
    %v641 = vshll.u32 2131351028, %v632
    %v642 = vshrl.u32 2102212464, %v633
    %v643 = vor.u32 %v641, %v642
    %v644 = vshll.u32 2102212464, %v632
    %v645 = vshrl.u32 920167782, %v633
    %v646 = vor.u32 %v644, %v645
    %v647 = vshll.u32 920167782, %v632
    %v648 = vshrl.u32 1326507024, %v633
    %v649 = vor.u32 %v647, %v648
    %vm650 = vcmp.lt.s32.totalorder %v631, 1
    %vm651 = vcmp.lt.s32.totalorder %v631, 2
    %vm652 = vcmp.lt.s32.totalorder %v631, 3
    %vm653 = vcmp.lt.s32.totalorder %v631, 4
    %v654 = vsel %vm650, %v634, %v637
    %v655 = vsel %vm653, %v643, 2102212464
    %v656 = vsel %vm652, %v640, %v655
    %v657 = vsel %vm651, %v654, %v656
    %v658 = vsel %vm650, %v637, %v640
    %v659 = vsel %vm653, %v646, 920167782
    %v660 = vsel %vm652, %v643, %v659
    %v661 = vsel %vm651, %v658, %v660
    %v662 = vsel %vm650, %v640, %v643
    %v663 = vsel %vm653, %v649, 1326507024
    %v664 = vsel %vm652, %v646, %v663
    %v665 = vsel %vm651, %v662, %v664
    %v666 = vshll.u32 %v626, 8
    %v667 = vand.u32 %v666, 65535
    %v668 = vshrl.u32 %v666, 16
    %v669 = vand.u32 %v665, 65535
    %v670 = vshrl.u32 %v665, 16
    %v671 = vmul.u32 %v667, %v669
    %v672 = vmul.u32 %v667, %v670
    %v673 = vmul.u32 %v668, %v669
    %v674 = vmul.u32 %v668, %v670
    %v675 = vshll.u32 %v672, 16
    %v676 = vshrl.u32 %v672, 16
    %v677 = vshll.u32 %v673, 16
    %v678 = vshrl.u32 %v673, 16
    %vm679 = vc.u32 %v671, %v675
    %v680 = vsel %vm679, 1, 0
    %v681 = vadd.s32 %v671, %v675
    %v682 = vadd.s32 %v674, %v680
    %vm683 = vc.u32 %v681, %v677
    %v684 = vsel %vm683, 1, 0
    %v685 = vadd.s32 %v681, %v677
    %v686 = vadd.s32 %v682, %v684
    %v687 = vadd.s32 %v686, %v676
    %v688 = vadd.s32 %v687, %v678
    %v689 = vand.u32 %v666, 65535
    %v690 = vshrl.u32 %v666, 16
    %v691 = vand.u32 %v661, 65535
    %v692 = vshrl.u32 %v661, 16
    %v693 = vmul.u32 %v689, %v691
    %v694 = vmul.u32 %v689, %v692
    %v695 = vmul.u32 %v690, %v691
    %v696 = vmul.u32 %v690, %v692
    %v697 = vshll.u32 %v694, 16
    %v698 = vshrl.u32 %v694, 16
    %v699 = vshll.u32 %v695, 16
    %v700 = vshrl.u32 %v695, 16
    %vm701 = vc.u32 %v693, %v697
    %v702 = vsel %vm701, 1, 0
    %v703 = vadd.s32 %v693, %v697
    %v704 = vadd.s32 %v696, %v702
    %vm705 = vc.u32 %v703, %v699
    %v706 = vsel %vm705, 1, 0
    %v707 = vadd.s32 %v703, %v699
    %v708 = vadd.s32 %v704, %v706
    %v709 = vadd.s32 %v708, %v698
    %v710 = vadd.s32 %v709, %v700
    %v711 = vmul.u32 %v666, %v657
    %v712 = vadd.s32 %v688, %v707
    %vm713 = vc.u32 %v688, %v707
    %v714 = vadd.s32 %v710, 1
    %v715 = vsel %vm713, %v714, %v710
    %v716 = vadd.s32 %v711, %v715
    %v717 = vadd.s32 %v716, 536870912
    %v718 = vshrl.u32 %v717, 30
    %v719 = vshll.u32 %v718, 30
    %v720 = vsub.s32 %v716, %v719
    %vm721 = vcmp.lt.s32.totalorder %v720, 0
    %v722 = vsub.s32 0, %v720
    %v723 = vsel %vm721, %v722, %v720
    %v724 = vclz %v723
    %v725 = vsub.s32 %v724, 2
    %vm726 = vcmp.gt.s32.totalorder 0, %v725
    %v727 = vsel %vm726, 0, %v725
    %v728 = vsub.s32 32, %v727
    %v729 = vshll.u32 %v720, %v727
    %v730 = vshrl.u32 %v712, %v728
    %v731 = vor.u32 %v729, %v730
    %v732 = vsub.s32 4294967266, %v727
    %v733 = vadd.s32 %v732, 127
    %v734 = vshll.u32 %v733, 23
    %v735 = vor.u32 4788187, %v734
    %v736 = vand.u32 2147483647, %v735
    %v738 = vcvt.s32.f32 %v731
    %v739 = vmul.f32 %v738, %v736
    %v740 = vxor.u32 %v739, 2147483648
    %v741 = vsel %vm620, %v740, %v739
    %v742 = vsub.s32 4, %v718
    %v743 = vsel %vm620, %v742, %v718
    %v744 = vsel %vm619, %v78, %v741
    %v745 = vsel %vm619, 0, %v743
    %v746 = vmul.f32 %v744, %v744
    %v747 = vmul.f32 %v746, -0.001358992
    %v748 = vadd.f32 %v747, 0.041655596
    %v749 = vmul.f32 %v746, %v748
    %v750 = vadd.f32 %v749, -0.4999988
    %v751 = vmul.f32 %v746, %v750
    %v752 = vadd.f32 1.0, %v751
    %v753 = vmul.f32 %v744, %v744
    %v754 = vmul.f32 %v753, -0.00019511016
    %v755 = vadd.f32 %v754, 0.008332121
    %v756 = vmul.f32 %v753, %v755
    %v757 = vadd.f32 %v756, -0.16666654
    %v758 = vmul.f32 %v753, %v757
    %v759 = vadd.f32 %v758, 1.0
    %v760 = vmul.f32 %v759, %v744
    %vm761 = vweird.f32 %v78
    %v762 = vand.u32 %v745, 3
    %vm763 = vcmp.lt.s32.totalorder %v762, 2
    %vm764 = vcmp.eq.s32.totalorder %v762, 0
    %v765 = vxor.u32 %v760, 2147483648
    %v766 = vsel %vm764, %v752, %v765
    %vm767 = vcmp.eq.s32.totalorder %v762, 2
    %v768 = vxor.u32 %v752, 2147483648
    %v769 = vsel %vm767, %v768, %v760
    %v770 = vsel %vm763, %v766, %v769
    %v771 = vsel %vm761, nan, %v770
    %vm772 = vcmask 123904
    %773 = vst.msk [vmem:[#allocation5] sm:$0x3] %vm772, %v771
    %v774 = vand.u32 2147483647, %v78
    %vm775 = vcmp.le.f32.partialorder %v774, 0.7853982
    %vm776 = vcmp.lt.s32.totalorder %v78, 0
    %v777 = vand.u32 %v78, 2139095040
    %v778 = vshrl.u32 %v777, 23
    %v779 = vsub.s32 %v778, 127
    %v780 = vand.u32 2147483647, %v78
    %v781 = vand.u32 %v780, 8388607
    %v782 = vor.u32 %v781, 8388608
    %v783 = vsub.s32 0, %v782
    %v784 = vadd.s32 %v779, 1
    %vm785 = vcmp.gt.s32.totalorder %v784, 0
    %v786 = vsel %vm785, %v784, 0
    %v787 = vshrl.u32 %v786, 5
    %v788 = vand.u32 %v786, 31
    %v789 = vsub.s32 32, %v788
    %v790 = vshrl.u32 683565275, %v789
    %v791 = vshll.u32 683565275, %v788
    %v792 = vshrl.u32 2475754826, %v789
    %v793 = vor.u32 %v791, %v792
    %v794 = vshll.u32 2475754826, %v788
    %v795 = vshrl.u32 2131351028, %v789
    %v796 = vor.u32 %v794, %v795
    %v797 = vshll.u32 2131351028, %v788
    %v798 = vshrl.u32 2102212464, %v789
    %v799 = vor.u32 %v797, %v798
    %v800 = vshll.u32 2102212464, %v788
    %v801 = vshrl.u32 920167782, %v789
    %v802 = vor.u32 %v800, %v801
    %v803 = vshll.u32 920167782, %v788
    %v804 = vshrl.u32 1326507024, %v789
    %v805 = vor.u32 %v803, %v804
    %vm806 = vcmp.lt.s32.totalorder %v787, 1
    %vm807 = vcmp.lt.s32.totalorder %v787, 2
    %vm808 = vcmp.lt.s32.totalorder %v787, 3
    %vm809 = vcmp.lt.s32.totalorder %v787, 4
    %v810 = vsel %vm806, %v790, %v793
    %v811 = vsel %vm809, %v799, 2102212464
    %v812 = vsel %vm808, %v796, %v811
    %v813 = vsel %vm807, %v810, %v812
    %v814 = vsel %vm806, %v793, %v796
    %v815 = vsel %vm809, %v802, 920167782
    %v816 = vsel %vm808, %v799, %v815
    %v817 = vsel %vm807, %v814, %v816
    %v818 = vsel %vm806, %v796, %v799
    %v819 = vsel %vm809, %v805, 1326507024
    %v820 = vsel %vm808, %v802, %v819
    %v821 = vsel %vm807, %v818, %v820
    %v822 = vshll.u32 %v782, 8
    %v823 = vand.u32 %v822, 65535
    %v824 = vshrl.u32 %v822, 16
    %v825 = vand.u32 %v821, 65535
    %v826 = vshrl.u32 %v821, 16
    %v827 = vmul.u32 %v823, %v825
    %v828 = vmul.u32 %v823, %v826
    %v829 = vmul.u32 %v824, %v825
    %v830 = vmul.u32 %v824, %v826
    %v831 = vshll.u32 %v828, 16
    %v832 = vshrl.u32 %v828, 16
    %v833 = vshll.u32 %v829, 16
    %v834 = vshrl.u32 %v829, 16
    %vm835 = vc.u32 %v827, %v831
    %v836 = vsel %vm835, 1, 0
    %v837 = vadd.s32 %v827, %v831
    %v838 = vadd.s32 %v830, %v836
    %vm839 = vc.u32 %v837, %v833
    %v840 = vsel %vm839, 1, 0
    %v841 = vadd.s32 %v837, %v833
    %v842 = vadd.s32 %v838, %v840
    %v843 = vadd.s32 %v842, %v832
    %v844 = vadd.s32 %v843, %v834
    %v845 = vand.u32 %v822, 65535
    %v846 = vshrl.u32 %v822, 16
    %v847 = vand.u32 %v817, 65535
    %v848 = vshrl.u32 %v817, 16
    %v849 = vmul.u32 %v845, %v847
    %v850 = vmul.u32 %v845, %v848
    %v851 = vmul.u32 %v846, %v847
    %v852 = vmul.u32 %v846, %v848
    %v853 = vshll.u32 %v850, 16
    %v854 = vshrl.u32 %v850, 16
    %v855 = vshll.u32 %v851, 16
    %v856 = vshrl.u32 %v851, 16
    %vm857 = vc.u32 %v849, %v853
    %v858 = vsel %vm857, 1, 0
    %v859 = vadd.s32 %v849, %v853
    %v860 = vadd.s32 %v852, %v858
    %vm861 = vc.u32 %v859, %v855
    %v862 = vsel %vm861, 1, 0
    %v863 = vadd.s32 %v859, %v855
    %v864 = vadd.s32 %v860, %v862
    %v865 = vadd.s32 %v864, %v854
    %v866 = vadd.s32 %v865, %v856
    %v867 = vmul.u32 %v822, %v813
    %v868 = vadd.s32 %v844, %v863
    %vm869 = vc.u32 %v844, %v863
    %v870 = vadd.s32 %v866, 1
    %v871 = vsel %vm869, %v870, %v866
    %v872 = vadd.s32 %v867, %v871
    %v873 = vadd.s32 %v872, 536870912
    %v874 = vshrl.u32 %v873, 30
    %v875 = vshll.u32 %v874, 30
    %v876 = vsub.s32 %v872, %v875
    %vm877 = vcmp.lt.s32.totalorder %v876, 0
    %v878 = vsub.s32 0, %v876
    %v879 = vsel %vm877, %v878, %v876
    %v880 = vclz %v879
    %v881 = vsub.s32 %v880, 2
    %vm882 = vcmp.gt.s32.totalorder 0, %v881
    %v883 = vsel %vm882, 0, %v881
    %v884 = vsub.s32 32, %v883
    %v885 = vshll.u32 %v876, %v883
    %v886 = vshrl.u32 %v868, %v884
    %v887 = vor.u32 %v885, %v886
    %v888 = vsub.s32 4294967266, %v883
    %v889 = vadd.s32 %v888, 127
    %v890 = vshll.u32 %v889, 23
    %v891 = vor.u32 4788187, %v890
    %v892 = vand.u32 2147483647, %v891
    %v894 = vcvt.s32.f32 %v887
    %v895 = vmul.f32 %v894, %v892
    %v896 = vxor.u32 %v895, 2147483648
    %v897 = vsel %vm776, %v896, %v895
    %v898 = vsub.s32 4, %v874
    %v899 = vsel %vm776, %v898, %v874
    %v900 = vsel %vm775, %v78, %v897
    %v901 = vsel %vm775, 0, %v899
    %v902 = vmul.f32 %v900, %v900
    %v903 = vmul.f32 %v902, -0.001358992
    %v904 = vadd.f32 %v903, 0.041655596
    %v905 = vmul.f32 %v902, %v904
    %v906 = vadd.f32 %v905, -0.4999988
    %v907 = vmul.f32 %v902, %v906
    %v908 = vadd.f32 1.0, %v907
    %v909 = vmul.f32 %v900, %v900
    %v910 = vmul.f32 %v909, -0.00019511016
    %v911 = vadd.f32 %v910, 0.008332121
    %v912 = vmul.f32 %v909, %v911
    %v913 = vadd.f32 %v912, -0.16666654
    %v914 = vmul.f32 %v909, %v913
    %v915 = vadd.f32 %v914, 1.0
    %v916 = vmul.f32 %v915, %v900
    %vm917 = vweird.f32 %v78
    %v918 = vadd.s32 %v901, 3
    %v919 = vand.u32 %v918, 3
    %vm920 = vcmp.lt.s32.totalorder %v919, 2
    %vm921 = vcmp.eq.s32.totalorder %v919, 0
    %v922 = vxor.u32 %v916, 2147483648
    %v923 = vsel %vm921, %v908, %v922
    %vm924 = vcmp.eq.s32.totalorder %v919, 2
    %v925 = vxor.u32 %v908, 2147483648
    %v926 = vsel %vm924, %v925, %v916
    %v927 = vsel %vm920, %v923, %v926
    %v928 = vsel %vm917, nan, %v927
    %929 = vst.msk [vmem:[#allocation6] sm:$0x3] %vm772, %v928
    %931 = vrot.lane.b32.xlu0 %v616, 16
    %v932 = vpop.permute.xlu0 %931
    %v934 = vmul.f32 %v78, %v932
    %936 = vrot.lane.b32.xlu0 %v934, 112
    %v937 = vpop.permute.xlu0 %936
    %939 = vst.msk [vmem:[#allocation8] sm:$0x3] %vm772, %v937
    %940 = vrot.lane.b32.xlu0 %v616, 32
    %v941 = vpop.permute.xlu0 %940
    %v943 = vmul.f32 %v78, %v941
    %945 = vrot.lane.b32.xlu0 %v943, 96
    %v946 = vpop.permute.xlu0 %945
    %948 = vst.msk [vmem:[#allocation9] sm:$0x3] %vm772, %v946
    // Predicated region
    $region30: #{tpu_custom_call.1} parent=1 // pred_check
      _
    $region31: #{tpu_custom_call.1} parent=1 // pred_check_branch
      %950 = sbr.rel (0) target = $region33
    $region32: #{tpu_custom_call.1} parent=1 // pred_region
      %952 = vsyncadd [#allocation4], 0
      %s954 = sshll.u32 [#allocation5], 4
      %s955 = int_to_ptr.vmem [resolvable:$true] %s954
      %s956 = sshll.u32 %s6, 4
      %s957 = int_to_ptr.hbm [resolvable:$true] %s956
      %959 = dma.vmem_to_hbm [thread:$0]  %s955, 32, %s957, [#allocation4]
    $region33: #{tpu_custom_call.1} parent=1 // pred_fallthru
      _
    // Predicated region
    $region34: #{tpu_custom_call.1} parent=1 // pred_check
      _
    $region35: #{tpu_custom_call.1} parent=1 // pred_check_branch
      %961 = sbr.rel (0) target = $region37
    $region36: #{tpu_custom_call.1} parent=1 // pred_region
      %963 = vsyncadd [#allocation7], 0
      %s965 = sshll.u32 [#allocation6], 4
      %s966 = int_to_ptr.vmem [resolvable:$true] %s965
      %s967 = sshll.u32 %s7, 4
      %s968 = int_to_ptr.hbm [resolvable:$true] %s967
      %970 = dma.vmem_to_hbm [thread:$0]  %s966, 32, %s968, [#allocation7]
    $region37: #{tpu_custom_call.1} parent=1 // pred_fallthru
      _
    // Predicated region
    $region38: #{tpu_custom_call.1} parent=1 // pred_check
      _
    $region39: #{tpu_custom_call.1} parent=1 // pred_check_branch
      %972 = sbr.rel (0) target = $region41
    $region40: #{tpu_custom_call.1} parent=1 // pred_region
      %974 = vsyncadd [#allocation7], 0
      %s976 = sshll.u32 [#allocation8], 4
      %s977 = int_to_ptr.vmem [resolvable:$true] %s976
      %s978 = sshll.u32 %s8, 4
      %s979 = int_to_ptr.hbm [resolvable:$true] %s978
      %981 = dma.vmem_to_hbm [thread:$0]  %s977, 32, %s979, [#allocation7]
    $region41: #{tpu_custom_call.1} parent=1 // pred_fallthru
      _
    // Predicated region
    $region42: #{tpu_custom_call.1} parent=1 // pred_check
      _
    $region43: #{tpu_custom_call.1} parent=1 // pred_check_branch
      %983 = sbr.rel (0) target = $region45
    $region44: #{tpu_custom_call.1} parent=1 // pred_region
      %985 = vsyncadd [#allocation10], 0
      %s987 = sshll.u32 [#allocation9], 4
      %s988 = int_to_ptr.vmem [resolvable:$true] %s987
      %s989 = sshll.u32 %s9, 4
      %s990 = int_to_ptr.hbm [resolvable:$true] %s989
      %992 = dma.vmem_to_hbm [thread:$0]  %s988, 32, %s990, [#allocation10]
    $region45: #{tpu_custom_call.1} parent=1 // pred_fallthru
      _
    // Predicated region
    $region46: #{tpu_custom_call.1} parent=1 // pred_check
      _
    $region47: #{tpu_custom_call.1} parent=1 // pred_check_branch
      %994 = sbr.rel (0) target = $region49
    $region48: #{tpu_custom_call.1} parent=1 // pred_region
      %996 = dma.done [#allocation4], 32
    $region49: #{tpu_custom_call.1} parent=1 // pred_fallthru
      _
    // Predicated region
    $region50: #{tpu_custom_call.1} parent=1 // pred_check
      _
    $region51: #{tpu_custom_call.1} parent=1 // pred_check_branch
      %998 = sbr.rel (0) target = $region53
    $region52: #{tpu_custom_call.1} parent=1 // pred_region
      %1000 = dma.done [#allocation7], 32
    $region53: #{tpu_custom_call.1} parent=1 // pred_fallthru
      _
    // Predicated region
    $region54: #{tpu_custom_call.1} parent=1 // pred_check
      _
    $region55: #{tpu_custom_call.1} parent=1 // pred_check_branch
      %1002 = sbr.rel (0) target = $region57
    $region56: #{tpu_custom_call.1} parent=1 // pred_region
      %1004 = dma.done [#allocation7], 32
    $region57: #{tpu_custom_call.1} parent=1 // pred_fallthru
      _
    // Predicated region
    $region58: #{tpu_custom_call.1} parent=1 // pred_check
      _
    $region59: #{tpu_custom_call.1} parent=1 // pred_check_branch
      %1006 = sbr.rel (0) target = $region61
    $region60: #{tpu_custom_call.1} parent=1 // pred_region
      %1008 = dma.done [#allocation10], 32
    $region61: #{tpu_custom_call.1} parent=1 // pred_fallthru
      _
    %1009 = vsyncpa [#allocation3], 1
    %1010 = vsyncpa [#allocation4], 1
    %1011 = vsyncpa [#allocation7], 1
    %1012 = vsyncpa [#allocation10], 1

</llo_original>
